<compile_context>
chip_gen: v7x
topology: tpu7x:2x2x1
jax: 0.10.0
libtpu: 0.0.40
codegen_flags: <defaults>
</compile_context>

<pallas_src>
import functools

import numpy as np

import jax
import jax.numpy as jnp
from jax.experimental import pallas as pl
from jax.experimental.pallas import tpu as pltpu


# --------------------------------------------------------------------------- helpers
def _round_up(x: int, m: int) -> int:
    return ((x + m - 1) // m) * m


def _tile(total: int, cap: int, align: int):
    """Padding-aware tile pick: tile is a multiple of `align`, <= cap, and
    tile * nblocks hugs `total` instead of padding up to a multiple of the cap."""
    total_a = _round_up(total, align)
    nblocks = max(1, -(-total_a // cap))
    tile = _round_up(-(-total_a // nblocks), align)
    return tile, tile * nblocks


def _device_kind() -> str:
    try:
        return jax.devices()[0].device_kind.lower()
    except Exception:  # pragma: no cover
        return ""


def _num_tensorcores(kind: str) -> int:
    return 2 if "v7" in kind else 1


def _vmem_cap_bytes(kind: str) -> int:
    if "v7" in kind:                      # 64 MiB/TC physical -> leave compiler headroom
        return 48 * 1024 * 1024
    if "v5" in kind or "v6" in kind:      # 128 MiB physical
        return 100 * 1024 * 1024
    return 64 * 1024 * 1024


_INTERP_BY_CODE = {0: "nearest", 2: "bilinear", 3: "bicubic"}


def _normalize_interp(interpolation):
    if isinstance(interpolation, str):
        mode = interpolation.lower()
    elif isinstance(interpolation, int):
        mode = _INTERP_BY_CODE.get(interpolation, "bicubic")
    else:  # e.g. an InterpolationMode-like enum with .value
        v = getattr(interpolation, "value", "bicubic")
        mode = v.lower() if isinstance(v, str) else _INTERP_BY_CODE.get(v, "bicubic")
    if mode not in ("nearest", "bilinear", "bicubic"):
        raise ValueError(f"unsupported interpolation: {interpolation!r}")
    return mode


def _perspective_coeffs(startpoints, endpoints):
    """Solve for (a..h) so that H(endpoint_i) = startpoint_i (torchvision convention)."""
    a = np.zeros((8, 8), dtype=np.float64)
    b = np.zeros((8,), dtype=np.float64)
    for i, ((sx, sy), (ex, ey)) in enumerate(zip(startpoints, endpoints)):
        a[2 * i] = [ex, ey, 1, 0, 0, 0, -sx * ex, -sx * ey]
        a[2 * i + 1] = [0, 0, 0, ex, ey, 1, -sy * ex, -sy * ey]
        b[2 * i], b[2 * i + 1] = sx, sy
    return np.linalg.solve(a, b).astype(np.float32)


def _source_coords(coeffs, height, width):
    """Per-output-pixel source coordinates (pixel units), torchvision tensor-path math."""
    a, b, c, d, e, f, g, h = (coeffs[i] for i in range(8))
    bx = jnp.broadcast_to(jnp.arange(width, dtype=jnp.float32)[None, :] + 0.5, (height, width))
    by = jnp.broadcast_to(jnp.arange(height, dtype=jnp.float32)[:, None] + 0.5, (height, width))
    denom = g * bx + h * by + 1.0
    sx = (a * bx + b * by + c) / denom - 0.5
    sy = (d * bx + e * by + f) / denom - 0.5
    return sx.reshape(-1), sy.reshape(-1)


def _cubic_kernel(t):
    """Keys cubic convolution kernel, a = -0.75 (matches PyTorch grid_sample bicubic)."""
    a = -0.75
    at = jnp.abs(t)
    return jnp.where(
        at <= 1.0,
        ((a + 2.0) * at - (a + 3.0)) * at * at + 1.0,
        jnp.where(at < 2.0, (((at - 5.0) * at + 8.0) * at - 4.0) * a, 0.0),
    )


def _axis_taps(src, in_size, mode):
    """(P, in_size) interpolation weights along one axis; OOB taps contribute 0."""
    grid = jnp.arange(in_size, dtype=jnp.int32)[None, :]
    if mode == "nearest":
        taps = [(jnp.round(src).astype(jnp.int32), jnp.ones_like(src))]
    elif mode == "bilinear":
        lo = jnp.floor(src).astype(jnp.int32)
        f = src - lo.astype(src.dtype)
        taps = [(lo, 1.0 - f), (lo + 1, f)]
    else:  # bicubic
        base = jnp.floor(src).astype(jnp.int32)
        t = src - base.astype(src.dtype)
        taps = [(base - 1 + i, _cubic_kernel(t - (i - 1.0))) for i in range(4)]
    w = jnp.zeros((src.shape[0], in_size), jnp.float32)
    for idx, wt in taps:
        hit = (grid == idx[:, None]).astype(jnp.float32)  # one-hot; all-zero row when OOB
        w = w + hit * wt[:, None].astype(jnp.float32)
    return w


def _build_warp_matrix(coeffs, height, width, interpolation, fill, compute_dtype):
    """Fused sampling matrix (already transposed, already in compute dtype) + f32 bias.

    out_flat = x_flat @ W_T + bias   with   W_T: (HW_in, HW_out),  bias: (HW_out,)
    """
    sx, sy = _source_coords(coeffs, height, width)
    wy = _axis_taps(sy, height, interpolation)                    # (P, H)
    wx = _axis_taps(sx, width, interpolation)                     # (P, W)
    mask = jnp.sum(wy, axis=1) * jnp.sum(wx, axis=1)              # sampled all-ones image
    wy_m = (wy * mask[:, None]).astype(compute_dtype)             # fold mask into y-taps
    wx_c = wx.astype(compute_dtype)
    p = height * width
    # build directly in the (HW_in, HW_out) layout the matmul consumes: no separate .T/.astype
    w_eff_t = jnp.einsum("ph,pw->hwp", wy_m, wx_c).reshape(p, p)
    bias = ((1.0 - mask) * fill).astype(jnp.float32)              # (HW_out,)
    return w_eff_t, bias


# --------------------------------------------------------------------------- kernel
def _warp_matmul_kernel(x_ref, w_ref, b_ref, o_ref, acc_ref):
    # x_ref: (bm, tk)   w_ref: (tk, bn)   b_ref: (1, bn)   o_ref: (bm, bn)
    k = pl.program_id(2)

    @pl.when(k == 0)
    def _init():
        acc_ref[...] = jnp.zeros_like(acc_ref)

    acc_ref[...] += jnp.dot(x_ref[...], w_ref[...], preferred_element_type=jnp.float32)

    @pl.when(k == pl.num_programs(2) - 1)
    def _finalize():
        out = acc_ref[...] + b_ref[...]
        if jnp.issubdtype(o_ref.dtype, jnp.integer):
            info = jnp.iinfo(o_ref.dtype)
            out = jnp.clip(jnp.round(out), info.min, info.max)   # round + clamp (torchvision)
        o_ref[...] = out.astype(o_ref.dtype)


@functools.partial(jax.jit, static_argnames=("interpolation", "use_bf16"))
def _perspective_pallas(x_nchw, coeffs, fill, *, interpolation, use_bf16=True):
    n, c, h, w = x_nchw.shape
    nc, p = n * c, h * w
    orig_dtype = x_nchw.dtype

    # bf16 compute even for f32 inputs (f32 accumulate + f32 bias add); opt-out via flag
    if orig_dtype == jnp.bfloat16 or use_bf16:
        cdtype = jnp.bfloat16
    else:
        cdtype = jnp.float32
    el_c = jnp.dtype(cdtype).itemsize
    el_o = jnp.dtype(orig_dtype).itemsize

    kind = _device_kind()

    # -- tiling: lane-dense (x128) K/N tiles that hug p; bm keeps grid[0]=1 when possible --
    sub = {1: 32, 2: 16, 4: 8, 8: 8}
    align_m = max(sub.get(el_c, 8), sub.get(el_o, 8))
    bm, nc_p = _tile(nc, 1024, align_m)          # grid[0] == 1 up to 1024 planes
    tk, k_p = _tile(p, 512, 128)
    bn, n_p = _tile(p, 1024, 128)

    # dual-TensorCore split only on chips that actually have 2 TCs (v7x);
    # prefer keeping bn >= 512 / splitting rows over shrinking the lane-dense output.
    if _num_tensorcores(kind) >= 2 and (nc_p // bm) * (n_p // bn) < 2:
        if bn >= 1024:
            bn //= 2
        elif bm >= 2 * align_m:
            bm, nc_p = _tile(nc, _round_up(bm // 2, align_m), align_m)

    # -- build fused weights in final layout/dtype; pad only when actually needed --
    w_eff, bias = _build_warp_matrix(coeffs, h, w, interpolation, fill, cdtype)
    if (k_p, n_p) != (p, p):
        w_eff = jnp.pad(w_eff, ((0, k_p - p), (0, n_p - p)))
    bias = bias.reshape(1, p)
    if n_p != p:
        bias = jnp.pad(bias, ((0, 0), (0, n_p - p)))

    x_flat = x_nchw.reshape(nc, p).astype(cdtype)
    if (nc_p, k_p) != (nc, p):
        x_flat = jnp.pad(x_flat, ((0, nc_p - nc), (0, k_p - p)))

    grid = (nc_p // bm, n_p // bn, k_p // tk)
    gi, gj, gk = grid

    # honest cost estimate (W streamed per i-block, x per j-block, out in orig dtype)
    cost = pl.CostEstimate(
        flops=2 * nc_p * k_p * n_p,
        transcendentals=0,
        bytes_accessed=(gj * nc_p * k_p * el_c      # x stream
                        + gi * k_p * n_p * el_c     # W_eff stream (dominant)
                        + gi * gj * n_p * 4         # bias
                        + nc_p * n_p * el_o),       # output
    )

    # per-generation VMEM limit with headroom
    vmem_est = (2 * (bm * tk + tk * bn) * el_c + 2 * bn * 4
                + 2 * bm * bn * el_o + bm * bn * 4)
    vmem_limit = int(min(_vmem_cap_bytes(kind), max(32 * 1024 * 1024, 4 * vmem_est)))

    # optional deeper buffering on the W stream when there are many K steps
    w_index_map = lambda i, j, k: (k, j)
    w_spec = pl.BlockSpec((tk, bn), w_index_map)
    if gk >= 3:
        try:
            w_spec = pl.BlockSpec((tk, bn), w_index_map, pipeline_mode=pl.Buffered(3))
        except TypeError:
            pass

    out_pad = pl.pallas_call(
        _warp_matmul_kernel,
        out_shape=jax.ShapeDtypeStruct((nc_p, n_p), orig_dtype),
        grid_spec=pltpu.PrefetchScalarGridSpec(
            num_scalar_prefetch=0,
            grid=grid,
            in_specs=[
                pl.BlockSpec((bm, tk), lambda i, j, k: (i, k)),
                w_spec,
                pl.BlockSpec((1, bn), lambda i, j, k: (0, j)),
            ],
            out_specs=pl.BlockSpec((bm, bn), lambda i, j, k: (i, j)),
            scratch_shapes=[pltpu.VMEM((bm, bn), jnp.float32)],
        ),
        compiler_params=pltpu.CompilerParams(
            dimension_semantics=("parallel", "parallel", "arbitrary"),
            vmem_limit_bytes=vmem_limit,
        ),
        cost_estimate=cost,
    )(x_flat, w_eff, bias)

    return out_pad[:nc, :p].reshape(n, c, h, w)


# --------------------------------------------------------------------------- module
class PerspectiveFuc:
    """JAX/Pallas port of the PyTorch PerspectiveFuc module (RandomPerspective)."""

    def __init__(self, distortion_scale=0.5, p=0.5, interpolation="bicubic", fill=0,
                 seed=0, use_bf16=True):
        self.paras = {"distortion_scale": distortion_scale, "p": p,
                      "interpolation": interpolation, "fill": fill}
        self._interp = _normalize_interp(interpolation)
        self._use_bf16 = bool(use_bf16)
        self._rng = np.random.default_rng(seed)      # host-side RNG: no per-call device syncs
        self._last_coeffs = None                     # exposed for testing / reproducibility
        self._last_params = None

    # mirrors torchvision RandomPerspective.get_params (host-side numpy randint)
    def _get_params(self, width, height):
        d = self.paras["distortion_scale"]
        half_h, half_w = height // 2, width // 2
        r = self._rng

        def ri(lo, hi):
            return int(r.integers(lo, hi))

        topleft = [ri(0, int(d * half_w) + 1), ri(0, int(d * half_h) + 1)]
        topright = [ri(width - int(d * half_w) - 1, width), ri(0, int(d * half_h) + 1)]
        botright = [ri(width - int(d * half_w) - 1, width),
                    ri(height - int(d * half_h) - 1, height)]
        botleft = [ri(0, int(d * half_w) + 1), ri(height - int(d * half_h) - 1, height)]
        startpoints = [[0, 0], [width - 1, 0], [width - 1, height - 1], [0, height - 1]]
        endpoints = [topleft, topright, botright, botleft]
        return startpoints, endpoints

    def __call__(self, itemlist):
        if not (self.paras["p"] > float(self._rng.random())):
            return itemlist

        first = jnp.asarray(itemlist[0])
        h0, w0 = int(first.shape[-2]), int(first.shape[-1])
        startpoints, endpoints = self._get_params(w0, h0)
        coeffs = _perspective_coeffs(startpoints, endpoints)
        self._last_coeffs = coeffs
        self._last_params = (startpoints, endpoints)

        fill = self.paras["fill"]
        if isinstance(fill, (list, tuple)):
            # TODO(synk): per-channel fill lists are folded to their first element (scalar fill).
            fill = fill[0]
        fill = float(fill)

        # group same-shape/dtype items -> one pallas_call per group (same warp params)
        prepared, groups = [], {}
        for idx, item in enumerate(itemlist):
            arr = jnp.asarray(item)
            squeeze = arr.ndim == 3
            if squeeze:
                arr = arr[None]
            prepared.append((arr, squeeze))
            groups.setdefault((arr.shape, str(arr.dtype)), []).append(idx)

        out = [None] * len(itemlist)
        for (_shape, _dt), idxs in groups.items():
            stacked = jnp.concatenate([prepared[i][0] for i in idxs], axis=0)
            warped = _perspective_pallas(stacked, jnp.asarray(coeffs), fill,
                                         interpolation=self._interp,
                                         use_bf16=self._use_bf16)
            nb = prepared[idxs[0]][0].shape[0]
            for slot, i in enumerate(idxs):
                res = warped[slot * nb:(slot + 1) * nb]
                out[i] = res[0] if prepared[i][1] else res
        return out


# --------------------------------------------------------------------------- reference
def _ref_perspective(x_nchw, coeffs, interpolation, fill):
    """Pure-JAX, f32 gather-style reference of the same warp math (no Pallas, no bf16)."""
    n, c, h, w = x_nchw.shape
    sx, sy = _source_coords(jnp.asarray(coeffs), h, w)
    wy = _axis_taps(sy, h, interpolation)
    wx = _axis_taps(sx, w, interpolation)
    x = x_nchw.astype(jnp.float32)
    sampled = jnp.einsum("ph,pw,nchw->ncp", wy, wx, x)
    mask = jnp.sum(wy, axis=1) * jnp.sum(wx, axis=1)
    out = sampled * mask + (1.0 - mask) * fill
    return out.reshape(n, c, h, w)


if __name__ == "__main__":
    key = jax.random.PRNGKey(0)
    k1, k2 = jax.random.split(key)

    x1 = jax.random.normal(k1, (2, 4, 16, 16), dtype=jnp.float32)   # NCHW
    x2 = jax.random.normal(k2, (2, 4, 16, 16), dtype=jnp.float32)

    # p=1.0 so the warp (and thus the Pallas kernel) always runs in this demo
    module = PerspectiveFuc(distortion_scale=0.5, p=1.0, interpolation="bicubic",
                            fill=0.0, seed=0)
    outs = module([x1, x2])
    outs = [jax.block_until_ready(o) for o in outs]

    coeffs = jnp.asarray(module._last_coeffs)
    # tight check: same fused bf16 weights applied by a plain XLA matmul (catches any
    # tiling / transpose / bias / accumulator bug in the Pallas path)
    w_t, bias = _build_warp_matrix(coeffs, 16, 16, "bicubic", 0.0, jnp.bfloat16)
    w_f32 = w_t.astype(jnp.float32)
    for x, o in zip((x1, x2), outs):
        assert o.shape == x.shape and o.dtype == x.dtype, (o.shape, o.dtype)
        xf = x.reshape(-1, 16 * 16).astype(jnp.bfloat16).astype(jnp.float32)
        tight = (xf @ w_f32 + bias[None, :]).reshape(x.shape)
        err_tight = float(jnp.max(jnp.abs(o - tight)))
        assert err_tight < 1e-3, err_tight
        # loose check against the independent full-f32 reference (bf16 quantization slack)
        loose = _ref_perspective(x, coeffs, "bicubic", 0.0)
        err_loose = float(jnp.max(jnp.abs(o - loose)))
        assert err_loose < 0.1, err_loose

    print("KERNEL_OK")
</pallas_src>

<mosaic_0001>
module attributes {stable_mosaic.version = 11 : i64} {
  func.func @_warp_matmul_kernel(%arg0: i32, %arg1: i32, %arg2: i32, %arg3: memref<16x256xbf16, #tpu.memory_space<vmem>>, %arg4: memref<256x256xbf16, #tpu.memory_space<vmem>>, %arg5: memref<1x256xf32, #tpu.memory_space<vmem>>, %arg6: memref<16x256xf32, #tpu.memory_space<vmem>>, %arg7: memref<16x256xf32, #tpu.memory_space<vmem>>) attributes {dimension_semantics = [#tpu.dimension_semantics<parallel>, #tpu.dimension_semantics<parallel>, #tpu.dimension_semantics<arbitrary>], iteration_bounds = array<i64: 1, 1, 1>, scalar_prefetch = 0 : i64, scratch_operands = 1 : i64, tpu.core_type = #tpu.core_type<tc>, window_params = [{transform_indices = @transform_0, window_bounds = array<i64: 16, 256>}, {transform_indices = @transform_1, window_bounds = array<i64: 256, 256>}, {transform_indices = @transform_2, window_bounds = array<i64: 1, 256>}, {transform_indices = @transform_3, window_bounds = array<i64: 16, 256>}]} {
    %c0_i32 = arith.constant 0 : i32
    %0 = arith.cmpi eq, %arg2, %c0_i32 : i32
    %1 = arith.extui %0 : i1 to i32
    %c0_i32_0 = arith.constant 0 : i32
    %2 = arith.cmpi ne, %1, %c0_i32_0 : i32
    scf.if %2 {
      %cst_10 = arith.constant 0.000000e+00 : f32
      %12 = vector.broadcast %cst_10 : f32 to vector<16x256xf32>
      %c0_11 = arith.constant 0 : index
      %c0_12 = arith.constant 0 : index
      %13 = vector.load %arg7[%c0_11, %c0_12] : memref<16x256xf32, #tpu.memory_space<vmem>>, vector<16x256xf32>
      tpu.vector_store %arg7[%c0_11, %c0_12], %12 {strides = array<i32>} : memref<16x256xf32, #tpu.memory_space<vmem>>, vector<16x256xf32>,
    } else {
    }
    %c0 = arith.constant 0 : index
    %c0_1 = arith.constant 0 : index
    %3 = vector.load %arg7[%c0, %c0_1] : memref<16x256xf32, #tpu.memory_space<vmem>>, vector<16x256xf32>
    %c0_2 = arith.constant 0 : index
    %c0_3 = arith.constant 0 : index
    %4 = vector.load %arg3[%c0_2, %c0_3] : memref<16x256xbf16, #tpu.memory_space<vmem>>, vector<16x256xbf16>
    %c0_4 = arith.constant 0 : index
    %c0_5 = arith.constant 0 : index
    %5 = vector.load %arg4[%c0_4, %c0_5] : memref<256x256xbf16, #tpu.memory_space<vmem>>, vector<256x256xbf16>
    %cst = arith.constant dense<0.000000e+00> : vector<16x256xf32>
    %6 = tpu.matmul %4, %5, %cst {dimension_numbers = #tpu.dot_dimension_numbers<[1], [0], [0], [1], [0, 0, 1, 1], [], []>} : vector<16x256xbf16>, vector<256x256xbf16>, vector<16x256xf32> -> vector<16x256xf32>
    %7 = arith.addf %3, %6 : vector<16x256xf32>
    %c0_6 = arith.constant 0 : index
    %c0_7 = arith.constant 0 : index
    %8 = vector.load %arg7[%c0_6, %c0_7] : memref<16x256xf32, #tpu.memory_space<vmem>>, vector<16x256xf32>
    tpu.vector_store %arg7[%c0_6, %c0_7], %7 {strides = array<i32>} : memref<16x256xf32, #tpu.memory_space<vmem>>, vector<16x256xf32>,
    %c0_i32_8 = arith.constant 0 : i32
    %9 = arith.cmpi eq, %arg2, %c0_i32_8 : i32
    %10 = arith.extui %9 : i1 to i32
    %c0_i32_9 = arith.constant 0 : i32
    %11 = arith.cmpi ne, %10, %c0_i32_9 : i32
    scf.if %11 {
      %c0_10 = arith.constant 0 : index
      %c0_11 = arith.constant 0 : index
      %12 = vector.load %arg7[%c0_10, %c0_11] : memref<16x256xf32, #tpu.memory_space<vmem>>, vector<16x256xf32>
      %c0_12 = arith.constant 0 : index
      %c0_13 = arith.constant 0 : index
      %13 = vector.load %arg5[%c0_12, %c0_13] : memref<1x256xf32, #tpu.memory_space<vmem>>, vector<1x256xf32>
      %14 = vector.broadcast %13 : vector<1x256xf32> to vector<16x256xf32>
      %15 = arith.addf %12, %14 : vector<16x256xf32>
      %c0_14 = arith.constant 0 : index
      %c0_15 = arith.constant 0 : index
      %16 = vector.load %arg6[%c0_14, %c0_15] : memref<16x256xf32, #tpu.memory_space<vmem>>, vector<16x256xf32>
      tpu.vector_store %arg6[%c0_14, %c0_15], %15 {strides = array<i32>} : memref<16x256xf32, #tpu.memory_space<vmem>>, vector<16x256xf32>,
    } else {
    }
    return
  }
  func.func @transform_0(%arg0: i32, %arg1: i32, %arg2: i32) -> (i32, i32) {
    %c0_i32 = arith.constant 0 : i32
    return %arg0, %arg2 : i32, i32
  }
  func.func @transform_1(%arg0: i32, %arg1: i32, %arg2: i32) -> (i32, i32) {
    %c0_i32 = arith.constant 0 : i32
    return %arg2, %arg1 : i32, i32
  }
  func.func @transform_2(%arg0: i32, %arg1: i32, %arg2: i32) -> (i32, i32) {
    %c0_i32 = arith.constant 0 : i32
    %c0_i32_0 = arith.constant 0 : i32
    return %c0_i32, %arg1 : i32, i32
  }
  func.func @transform_3(%arg0: i32, %arg1: i32, %arg2: i32) -> (i32, i32) {
    %c0_i32 = arith.constant 0 : i32
    return %arg0, %arg1 : i32, i32
  }
}

</mosaic_0001>

<llo_original>
// kernel: _perspective_pallas.1
$region0: #{_perspective_pallas.1}
  #allocation0 [shape = 'u32[]', space=smem, size = 0x4, offset = 0x4, fixed_abs, tag = 'smem constant byte address 0x4 - core index']
  #allocation1 [shape = 'u32[144,128]{1,0:T(1,128)}', space=vmem, size = 0x12000, scoped, tag = 'internal scratch']
  #allocation2 [shape = 'f32[16,256]{1,0:T(8,128)}', space=vmem, size = 0x4000, scoped, tag = 'scratch operand']
  %s0 = inlined_call_operand.vmem [shape: bf16[16,256], index: 0, kind: input, shape index: {}]
  %s1 = inlined_call_operand.vmem [shape: bf16[256,256], index: 1, kind: input, shape index: {}]
  %s2 = inlined_call_operand.vmem [shape: f32[1,256], index: 2, kind: input, shape index: {}]
  %s3 = inlined_call_operand.vmem [shape: f32[16,256], index: 3, kind: output, shape index: {}]
  %s4 = sld [smem:[#allocation0]]
  $region30: #{_perspective_pallas.1} parent=0
    _
  %s6 = ssub.s32 1, %s4
  %s7 = scalar_select 0, %s6, %s4
  // Predicated region
  $region2: #{_perspective_pallas.1} parent=0 // pred_check
    _
  $region3: #{_perspective_pallas.1} parent=0 // pred_check_branch
    %9 = sbr.rel (0) target = $region5
  $region4: #{_perspective_pallas.1} parent=0 // pred_region
    _
  $region5: #{_perspective_pallas.1} parent=0 // pred_fallthru
    _
  // Predicated region
  $region6: #{_perspective_pallas.1} parent=0 // pred_check
    _
  $region7: #{_perspective_pallas.1} parent=0 // pred_check_branch
    %11 = sbr.rel (0) target = $region9
  $region8: #{_perspective_pallas.1} parent=0 // pred_region
    _
  $region9: #{_perspective_pallas.1} parent=0 // pred_fallthru
    _
  // Predicated region
  $region10: #{_perspective_pallas.1} parent=0 // pred_check
    _
  $region11: #{_perspective_pallas.1} parent=0 // pred_check_branch
    %13 = sbr.rel (0) target = $region13
  $region12: #{_perspective_pallas.1} parent=0 // pred_region
    _
  $region13: #{_perspective_pallas.1} parent=0 // pred_fallthru
    _
  %p14 = scmp.eq.s32.totalorder 0, 0
  // Predicated region
  $region14: #{_perspective_pallas.1} parent=0 // pred_check
    %p15 = pneg %p14
  $region15: #{_perspective_pallas.1} parent=0 // pred_check_branch
    %17 = sbr.rel (%p15) target = $region17
  $region16: #{_perspective_pallas.1} parent=0 // pred_region
    %18 = vst [vmem:[#allocation2] sm:$0xff] 0.0
    %19 = vst [vmem:[#allocation2 + $0x8] sm:$0xff] 0.0
    %20 = vst [vmem:[#allocation2 + $0x10] sm:$0xff] 0.0
    %21 = vst [vmem:[#allocation2 + $0x18] sm:$0xff] 0.0
  $region17: #{_perspective_pallas.1} parent=0 // pred_fallthru
    _
  %v22 = vld [vmem:[#allocation2] sm:$0xff]
  %v23 = vld [vmem:[#allocation2 + $0x8] sm:$0xff]
  %v24 = vld [vmem:[#allocation2 + $0x10] sm:$0xff]
  %v25 = vld [vmem:[#allocation2 + $0x18] sm:$0xff]
  %v26 = vld [vmem:[%s0] sm:$0xff]
  %v27 = vld [vmem:[%s0 + $0x8] sm:$0xff]
  %v28 = vld [vmem:[%s1] sm:$0xff]
  %v29 = vld [vmem:[%s1 + $0x8] sm:$0xff]
  %v30 = vld [vmem:[%s1 + $0x10] sm:$0xff]
  %v31 = vld [vmem:[%s1 + $0x18] sm:$0xff]
  %v32 = vld [vmem:[%s1 + $0x20] sm:$0xff]
  %v33 = vld [vmem:[%s1 + $0x28] sm:$0xff]
  %v34 = vld [vmem:[%s1 + $0x30] sm:$0xff]
  %v35 = vld [vmem:[%s1 + $0x38] sm:$0xff]
  %v36 = vld [vmem:[%s1 + $0x40] sm:$0xff]
  %v37 = vld [vmem:[%s1 + $0x48] sm:$0xff]
  %v38 = vld [vmem:[%s1 + $0x50] sm:$0xff]
  %v39 = vld [vmem:[%s1 + $0x58] sm:$0xff]
  %v40 = vld [vmem:[%s1 + $0x60] sm:$0xff]
  %v41 = vld [vmem:[%s1 + $0x68] sm:$0xff]
  %v42 = vld [vmem:[%s1 + $0x70] sm:$0xff]
  %v43 = vld [vmem:[%s1 + $0x78] sm:$0xff]
  %v44 = vld [vmem:[%s1 + $0x80] sm:$0xff]
  %v45 = vld [vmem:[%s1 + $0x88] sm:$0xff]
  %v46 = vld [vmem:[%s1 + $0x90] sm:$0xff]
  %v47 = vld [vmem:[%s1 + $0x98] sm:$0xff]
  %v48 = vld [vmem:[%s1 + $0xa0] sm:$0xff]
  %v49 = vld [vmem:[%s1 + $0xa8] sm:$0xff]
  %v50 = vld [vmem:[%s1 + $0xb0] sm:$0xff]
  %v51 = vld [vmem:[%s1 + $0xb8] sm:$0xff]
  %v52 = vld [vmem:[%s1 + $0xc0] sm:$0xff]
  %v53 = vld [vmem:[%s1 + $0xc8] sm:$0xff]
  %v54 = vld [vmem:[%s1 + $0xd0] sm:$0xff]
  %v55 = vld [vmem:[%s1 + $0xd8] sm:$0xff]
  %v56 = vld [vmem:[%s1 + $0xe0] sm:$0xff]
  %v57 = vld [vmem:[%s1 + $0xe8] sm:$0xff]
  %v58 = vld [vmem:[%s1 + $0xf0] sm:$0xff]
  %v59 = vld [vmem:[%s1 + $0xf8] sm:$0xff]
  %v62 = vunpack.c.l.b16 %v26
  %v63 = vunpack.c.h.b16 %v26
  %v64 = vunpack.c.l.b16 %v27
  %v65 = vunpack.c.h.b16 %v27
  %v66 = vpack.c.b16 %v64, %v62
  %v67 = vpack.c.b16 %v65, %v63
  %v102 = vunpack.c.l.b16 %v28
  %v103 = vunpack.c.h.b16 %v28
  %v104 = vunpack.c.l.b16 %v29
  %v105 = vunpack.c.h.b16 %v29
  %v106 = vunpack.c.l.b16 %v30
  %v107 = vunpack.c.h.b16 %v30
  %v108 = vunpack.c.l.b16 %v31
  %v109 = vunpack.c.h.b16 %v31
  %v110 = vunpack.c.l.b16 %v32
  %v111 = vunpack.c.h.b16 %v32
  %v112 = vunpack.c.l.b16 %v33
  %v113 = vunpack.c.h.b16 %v33
  %v114 = vunpack.c.l.b16 %v34
  %v115 = vunpack.c.h.b16 %v34
  %v116 = vunpack.c.l.b16 %v35
  %v117 = vunpack.c.h.b16 %v35
  %v118 = vunpack.c.l.b16 %v36
  %v119 = vunpack.c.h.b16 %v36
  %v120 = vunpack.c.l.b16 %v37
  %v121 = vunpack.c.h.b16 %v37
  %v122 = vunpack.c.l.b16 %v38
  %v123 = vunpack.c.h.b16 %v38
  %v124 = vunpack.c.l.b16 %v39
  %v125 = vunpack.c.h.b16 %v39
  %v126 = vunpack.c.l.b16 %v40
  %v127 = vunpack.c.h.b16 %v40
  %v128 = vunpack.c.l.b16 %v41
  %v129 = vunpack.c.h.b16 %v41
  %v130 = vunpack.c.l.b16 %v42
  %v131 = vunpack.c.h.b16 %v42
  %v132 = vunpack.c.l.b16 %v43
  %v133 = vunpack.c.h.b16 %v43
  %v134 = vunpack.c.l.b16 %v44
  %v135 = vunpack.c.h.b16 %v44
  %v136 = vunpack.c.l.b16 %v45
  %v137 = vunpack.c.h.b16 %v45
  %v138 = vunpack.c.l.b16 %v46
  %v139 = vunpack.c.h.b16 %v46
  %v140 = vunpack.c.l.b16 %v47
  %v141 = vunpack.c.h.b16 %v47
  %v142 = vunpack.c.l.b16 %v48
  %v143 = vunpack.c.h.b16 %v48
  %v144 = vunpack.c.l.b16 %v49
  %v145 = vunpack.c.h.b16 %v49
  %v146 = vunpack.c.l.b16 %v50
  %v147 = vunpack.c.h.b16 %v50
  %v148 = vunpack.c.l.b16 %v51
  %v149 = vunpack.c.h.b16 %v51
  %v150 = vunpack.c.l.b16 %v52
  %v151 = vunpack.c.h.b16 %v52
  %v152 = vunpack.c.l.b16 %v53
  %v153 = vunpack.c.h.b16 %v53
  %v154 = vunpack.c.l.b16 %v54
  %v155 = vunpack.c.h.b16 %v54
  %v156 = vunpack.c.l.b16 %v55
  %v157 = vunpack.c.h.b16 %v55
  %v158 = vunpack.c.l.b16 %v56
  %v159 = vunpack.c.h.b16 %v56
  %v160 = vunpack.c.l.b16 %v57
  %v161 = vunpack.c.h.b16 %v57
  %v162 = vunpack.c.l.b16 %v58
  %v163 = vunpack.c.h.b16 %v58
  %v164 = vunpack.c.l.b16 %v59
  %v165 = vunpack.c.h.b16 %v59
  %v166 = vpack.c.b16 %v104, %v102
  %v167 = vpack.c.b16 %v105, %v103
  %v168 = vpack.c.b16 %v108, %v106
  %v169 = vpack.c.b16 %v109, %v107
  %v170 = vpack.c.b16 %v112, %v110
  %v171 = vpack.c.b16 %v113, %v111
  %v172 = vpack.c.b16 %v116, %v114
  %v173 = vpack.c.b16 %v117, %v115
  %v174 = vpack.c.b16 %v120, %v118
  %v175 = vpack.c.b16 %v121, %v119
  %v176 = vpack.c.b16 %v124, %v122
  %v177 = vpack.c.b16 %v125, %v123
  %v178 = vpack.c.b16 %v128, %v126
  %v179 = vpack.c.b16 %v129, %v127
  %v180 = vpack.c.b16 %v132, %v130
  %v181 = vpack.c.b16 %v133, %v131
  %v182 = vpack.c.b16 %v136, %v134
  %v183 = vpack.c.b16 %v137, %v135
  %v184 = vpack.c.b16 %v140, %v138
  %v185 = vpack.c.b16 %v141, %v139
  %v186 = vpack.c.b16 %v144, %v142
  %v187 = vpack.c.b16 %v145, %v143
  %v188 = vpack.c.b16 %v148, %v146
  %v189 = vpack.c.b16 %v149, %v147
  %v190 = vpack.c.b16 %v152, %v150
  %v191 = vpack.c.b16 %v153, %v151
  %v192 = vpack.c.b16 %v156, %v154
  %v193 = vpack.c.b16 %v157, %v155
  %v194 = vpack.c.b16 %v160, %v158
  %v195 = vpack.c.b16 %v161, %v159
  %v196 = vpack.c.b16 %v164, %v162
  %v197 = vpack.c.b16 %v165, %v163
  %230 = vmatprep.subr.bf16.mxu0 %v167
  %231 = vmatpush1.bf16.msra.mxu0 %v166
  %232 = vmatprep.subr.bf16.mxu0 %v169
  %233 = vmatpush1.bf16.msra.mxu0 %v168
  %234 = vmatprep.subr.bf16.mxu0 %v171
  %235 = vmatpush1.bf16.msra.mxu0 %v170
  %236 = vmatprep.subr.bf16.mxu0 %v173
  %237 = vmatpush1.bf16.msra.mxu0 %v172
  %238 = vmatprep.subr.bf16.mxu0 %v175
  %239 = vmatpush1.bf16.msra.mxu0 %v174
  %240 = vmatprep.subr.bf16.mxu0 %v177
  %241 = vmatpush1.bf16.msra.mxu0 %v176
  %242 = vmatprep.subr.bf16.mxu0 %v179
  %243 = vmatpush1.bf16.msra.mxu0 %v178
  %244 = vmatprep.subr.bf16.mxu0 %v181
  %245 = vmatpush1.bf16.msra.mxu0 %v180
  %246 = vmatprep.subr.bf16.mxu0 %v183
  %247 = vmatpush1.bf16.msra.mxu0 %v182
  %248 = vmatprep.subr.bf16.mxu0 %v185
  %249 = vmatpush1.bf16.msra.mxu0 %v184
  %250 = vmatprep.subr.bf16.mxu0 %v187
  %251 = vmatpush1.bf16.msra.mxu0 %v186
  %252 = vmatprep.subr.bf16.mxu0 %v189
  %253 = vmatpush1.bf16.msra.mxu0 %v188
  %254 = vmatprep.subr.bf16.mxu0 %v191
  %255 = vmatpush1.bf16.msra.mxu0 %v190
  %256 = vmatprep.subr.bf16.mxu0 %v193
  %257 = vmatpush1.bf16.msra.mxu0 %v192
  %258 = vmatprep.subr.bf16.mxu0 %v195
  %259 = vmatpush1.bf16.msra.mxu0 %v194
  %260 = vmatprep.subr.bf16.mxu0 %v197
  %261 = vmatpush1.bf16.msra.mxu0 %v196
  %262 = vmatprep.mubr.bf16.mxu0 %v67
  %263 = vmatmul.mubr.bf16.gmra.mrb[0].mxu0 %v66
  %v264 = vpop.f32.mrb[0].mxu0
  %v265 = vadd.f32 0.0, %v264
  %v266 = vpop.f32.mrb[0].mxu0
  %v267 = vadd.f32 0.0, %v266
  %v268 = vpop.f32.mrb[0].mxu0
  %v269 = vadd.f32 0.0, %v268
  %v270 = vpop.f32.mrb[0].mxu0
  %v271 = vadd.f32 0.0, %v270
  %272 = vdwg.mxu0
  %v273 = vadd.f32 %v22, %v265
  %v274 = vadd.f32 %v23, %v267
  %v275 = vadd.f32 %v24, %v269
  %v276 = vadd.f32 %v25, %v271
  %277 = vst [vmem:[#allocation2] sm:$0xff] %v273
  %278 = vst [vmem:[#allocation2 + $0x8] sm:$0xff] %v274
  %279 = vst [vmem:[#allocation2 + $0x10] sm:$0xff] %v275
  %280 = vst [vmem:[#allocation2 + $0x18] sm:$0xff] %v276
  // Predicated region
  $region18: #{_perspective_pallas.1} parent=0 // pred_check
    %p281 = pneg %p14
  $region19: #{_perspective_pallas.1} parent=0 // pred_check_branch
    %283 = sbr.rel (%p281) target = $region21
  $region20: #{_perspective_pallas.1} parent=0 // pred_region
    %v284 = vld [vmem:[#allocation2] sm:$0xff]
    %v285 = vld [vmem:[#allocation2 + $0x8] sm:$0xff]
    %v286 = vld [vmem:[#allocation2 + $0x10] sm:$0xff]
    %v287 = vld [vmem:[#allocation2 + $0x18] sm:$0xff]
    %v288 = vld [vmem:[%s2] sm:$0x3]
    %v290 = vlaneseq
    %v291 = vshrl.u32 %v290, 7
    %v292 = vsub.s32 0, %v291
    %v293 = vrot.slane %v288, %v292
    %v294 = vlaneseq
    %v295 = vshrl.u32 %v294, 7
    %v296 = vsub.s32 1, %v295
    %v297 = vrot.slane %v288, %v296
    %v300 = vadd.f32 %v284, %v293
    %v301 = vadd.f32 %v285, %v297
    %v302 = vadd.f32 %v286, %v293
    %v303 = vadd.f32 %v287, %v297
    %304 = vst [vmem:[%s3] sm:$0xff] %v300
    %305 = vst [vmem:[%s3 + $0x8] sm:$0xff] %v301
    %306 = vst [vmem:[%s3 + $0x10] sm:$0xff] %v302
    %307 = vst [vmem:[%s3 + $0x18] sm:$0xff] %v303
  $region21: #{_perspective_pallas.1} parent=0 // pred_fallthru
    _
  // Predicated region
  $region22: #{_perspective_pallas.1} parent=0 // pred_check
    _
  $region23: #{_perspective_pallas.1} parent=0 // pred_check_branch
    %309 = sbr.rel (0) target = $region25
  $region24: #{_perspective_pallas.1} parent=0 // pred_region
    _
  $region25: #{_perspective_pallas.1} parent=0 // pred_fallthru
    _
  // Predicated region
  $region26: #{_perspective_pallas.1} parent=0 // pred_check
    _
  $region27: #{_perspective_pallas.1} parent=0 // pred_check_branch
    %311 = sbr.rel (0) target = $region29
  $region28: #{_perspective_pallas.1} parent=0 // pred_region
    _
  $region29: #{_perspective_pallas.1} parent=0 // pred_fallthru
    _

</llo_original>
